<compile_context>
chip_gen: v7x
topology: tpu7x:2x2x1
jax: 0.10.0
libtpu: 0.0.40
codegen_flags: <defaults>
</compile_context>

<pallas_src>
import functools

import jax
import jax.numpy as jnp
from jax.experimental import pallas as pl
from jax.experimental.pallas import tpu as pltpu


# ---------------------------------------------------------------------------
# Kernel
# ---------------------------------------------------------------------------
def _make_kernel(n_mid):
    """Kernel for one (tile_i, tile_j) output block; n_mid = #middle layers."""

    def kernel(hx_ref, hy_ref, *rest):
        # rest = (w_1, b_1, ..., w_nmid, b_nmid, w_last, b_last, o_ref)
        o_ref = rest[-1]
        b_last_ref = rest[-2]
        w_last_ref = rest[-3]
        mid_refs = rest[: 2 * n_mid]

        ti = hx_ref.shape[0]
        tj = hy_ref.shape[0]

        # First layer fused with pair construction.  The first Linear + bias
        # was already applied per-row in the wrapper (hx = x@Wx + b0,
        # hy = y@Wy), so only the broadcast add + ReLU remain here.  Runs in
        # bf16 on v6e/v7x (packed VPU), f32 on v5e.
        h = hx_ref[...][:, None, :] + hy_ref[...][None, :, :]      # [TI, TJ, h0]
        h = jnp.maximum(h, 0)
        h = h.reshape(ti * tj, h.shape[-1])                        # pair rows

        # Middle Linear+ReLU layers: bf16 MXU operands, f32 accumulation.
        for k in range(n_mid):
            w = mid_refs[2 * k][...]                               # bf16
            b = mid_refs[2 * k + 1][...]                           # f32
            h = jnp.dot(h.astype(w.dtype), w,
                        preferred_element_type=jnp.float32) + b
            h = jnp.maximum(h, 0.0)

        # Final Linear(h_last -> 1): VPU multiply + lane reduce (f32).
        # 1/temperature is already folded into w_last / b_last.
        h3 = h.reshape(ti, tj, h.shape[-1]).astype(jnp.float32)
        scores = jnp.sum(h3 * w_last_ref[...], axis=-1) + b_last_ref[...]  # [TI, TJ]
        o_ref[...] = scores.astype(o_ref.dtype)

    return kernel


# ---------------------------------------------------------------------------
# Tiling / hardware helpers (all evaluated at trace time, static shapes only)
# ---------------------------------------------------------------------------
def _round_up(n, m):
    return ((n + m - 1) // m) * m


def _tpu_vmem_capacity():
    try:
        return int(pltpu.get_tpu_info().vmem_capacity_bytes)
    except Exception:
        return 64 * 1024 * 1024            # conservative (v7x per-core VMEM)


def _elementwise_dtype():
    # bf16 VPU exists on v6e/v7x; v5e and older keep elementwise work in f32.
    try:
        kind = jax.devices()[0].device_kind.lower()
    except Exception:
        return jnp.float32
    if "tpu" not in kind:
        return jnp.float32
    for old in ("v2", "v3", "v4", "v5"):
        if old in kind:
            return jnp.float32
    return jnp.bfloat16


def _choose_tiling(batch_size, h_max, act_budget_bytes):
    """Return (tile_i, tile_j, pad_rows, pad_cols) for a [B, B] output."""
    # Pair-row cap: ~3 live f32 copies of a [pair_rows, h_max] activation.
    cap_rows = max(64, act_budget_bytes // (4 * max(h_max, 1) * 3))

    # Column (lane) tile: full padded width for small B (block == full dim is
    # legal), otherwise a lane-dense multiple of 128.
    if batch_size <= 256:
        tile_j = _round_up(batch_size, 8)
        if tile_j > 128 and cap_rows < 8 * tile_j:
            tile_j = 128
    else:
        tile_j = 256 if cap_rows >= 8 * 256 else 128
    pad_cols = _round_up(batch_size, tile_j)

    # Row (sublane) tile: multiple of 8, bounded so tile_i*tile_j <= cap_rows.
    max_ti = max(8, min(256, (cap_rows // tile_j) // 8 * 8))
    tile_i = min(max_ti, _round_up(batch_size, 8))

    # Megacore: if the j axis has a single block, keep >= 2 row blocks so both
    # TensorCores (v7x) get work, whenever B is big enough to split.
    if pad_cols // tile_j < 2 and batch_size >= 16:
        tile_i = min(tile_i, max(8, (_round_up(batch_size, 8) // 2) // 8 * 8))

    pad_rows = _round_up(batch_size, tile_i)
    return tile_i, tile_j, pad_rows, pad_cols


# ---------------------------------------------------------------------------
# Wrapper
# ---------------------------------------------------------------------------
def concat_critic_forward(x, y, params, *, temperature=1.0):
    """out[i, j] = MLP(concat(x[i], y[j])) / temperature, shape [B, B]."""
    batch_size, state_dim = x.shape
    skill_dim = y.shape[1]
    assert y.shape[0] == batch_size
    n_layers = len(params)
    n_mid = n_layers - 2
    assert n_mid >= 0, "need at least first + last Linear"
    del skill_dim  # implied by w0's row count

    inv_temp = jnp.float32(1.0 / float(temperature))
    ew_dtype = _elementwise_dtype()

    # --- First Linear hoisted to the wrapper (O(B*h0) work, plain XLA).
    #     W0 = [W_x; W_y] so the concat never materializes; b0 is folded into
    #     hx so the in-kernel broadcast add is a single pass. ---
    w0, b0 = params[0]
    w0 = w0.astype(jnp.float32)
    hx = x.astype(jnp.float32) @ w0[:state_dim, :] + b0.astype(jnp.float32)  # [B, h0]
    hy = y.astype(jnp.float32) @ w0[state_dim:, :]                           # [B, h0]
    h0 = hx.shape[1]

    # --- Fold 1/temperature into the (affine) last layer. ---
    w_last, b_last = params[-1]                                   # [h_last, 1], [1, 1]
    w_last_row = w_last.astype(jnp.float32).T * inv_temp          # [1, h_last]
    b_last_s = b_last.astype(jnp.float32).reshape(1, 1) * inv_temp

    # --- VMEM-aware tiling + padding. ---
    hidden_widths = [h0] + [w.shape[1] for (w, _) in params[1:-1]]
    h_max = max(hidden_widths)
    vmem_cap = _tpu_vmem_capacity()
    vmem_limit = int(min(vmem_cap - vmem_cap // 4, 100 * 1024 * 1024))
    act_budget = vmem_limit // 3
    tile_i, tile_j, pad_rows, pad_cols = _choose_tiling(batch_size, h_max, act_budget)
    grid = (pad_rows // tile_i, pad_cols // tile_j)

    hx_p = jnp.pad(hx, ((0, pad_rows - batch_size), (0, 0))).astype(ew_dtype)
    hy_p = jnp.pad(hy, ((0, pad_cols - batch_size), (0, 0))).astype(ew_dtype)

    operands = [hx_p, hy_p]
    in_specs = [
        pl.BlockSpec((tile_i, h0), lambda i, j: (i, 0)),   # hx rows -> out rows
        pl.BlockSpec((tile_j, h0), lambda i, j: (j, 0)),   # hy rows -> out cols
    ]
    # Middle layers: bf16 weights (MXU-native), f32 biases; constant index
    # maps keep them VMEM-resident across the whole grid.
    for (w, b) in params[1:-1]:
        operands.append(w.astype(jnp.bfloat16))
        operands.append(b.astype(jnp.float32).reshape(1, -1))
        in_specs.append(pl.BlockSpec(w.shape, lambda i, j: (0, 0)))
        in_specs.append(pl.BlockSpec((1, w.shape[1]), lambda i, j: (0, 0)))
    operands.extend([w_last_row, b_last_s])
    in_specs.append(pl.BlockSpec(w_last_row.shape, lambda i, j: (0, 0)))
    in_specs.append(pl.BlockSpec(b_last_s.shape, lambda i, j: (0, 0)))

    kernel = _make_kernel(n_mid)

    # Advisory cost estimate so XLA schedules surrounding ops correctly.
    pair_rows_total = pad_rows * pad_cols
    flops = 2 * pair_rows_total * h0                                       # add + relu
    flops += sum(2 * pair_rows_total * w.shape[0] * w.shape[1] for (w, _) in params[1:])
    bytes_accessed = (
        4 * pair_rows_total
        + 4 * (hx_p.size * grid[1] + hy_p.size * grid[0])
        + 4 * sum(w.size + b.size for (w, b) in params)
    )

    out = pl.pallas_call(
        kernel,
        out_shape=jax.ShapeDtypeStruct((pad_rows, pad_cols), jnp.float32),
        grid=grid,
        in_specs=in_specs,
        out_specs=pl.BlockSpec((tile_i, tile_j), lambda i, j: (i, j)),
        compiler_params=pltpu.CompilerParams(
            dimension_semantics=("parallel", "parallel"),
            vmem_limit_bytes=vmem_limit),
        cost_estimate=pl.CostEstimate(
            flops=int(flops), transcendentals=0,
            bytes_accessed=int(bytes_accessed)),
    )(*operands)

    return out[:batch_size, :batch_size]


# ---------------------------------------------------------------------------
# Reference / test scaffolding
# ---------------------------------------------------------------------------
def init_mlp_params(key, dims):
    """Deterministic init matching nn.Linear default: U(-1/sqrt(fan_in), +)."""
    params = []
    for i in range(len(dims) - 1):
        fan_in, fan_out = dims[i], dims[i + 1]
        key, kw, kb = jax.random.split(key, 3)
        bound = 1.0 / jnp.sqrt(fan_in)
        w = jax.random.uniform(kw, (fan_in, fan_out), jnp.float32, -bound, bound)
        b = jax.random.uniform(kb, (1, fan_out), jnp.float32, -bound, bound)
        params.append((w, b))
    return params


def reference_forward(x, y, params, *, temperature=1.0):
    """Pure-JAX mirror of ConcatCritic.forward (tile/concat/MLP/transpose)."""
    batch_size = x.shape[0]
    x_tiled = jnp.tile(x[None, :, :], (batch_size, 1, 1))
    y_tiled = jnp.tile(y[:, None, :], (1, batch_size, 1))
    h = jnp.concatenate((x_tiled, y_tiled), axis=2).reshape(batch_size * batch_size, -1)
    n_layers = len(params)
    for i, (w, b) in enumerate(params):
        h = h @ w + b
        if i < n_layers - 1:
            h = jnp.maximum(h, 0.0)
    scores = h / temperature
    return scores.reshape(batch_size, batch_size).T


if __name__ == "__main__":
    # Small, module-consistent shapes.
    batch = 8
    state_dim = 32
    skill_dim = 16
    hidden_dims = [64, 64]
    temperature = 2.0

    key = jax.random.PRNGKey(0)
    kx, ky, kp = jax.random.split(key, 3)
    x = jax.random.normal(kx, (batch, state_dim), jnp.float32)
    y = jax.random.normal(ky, (batch, skill_dim), jnp.float32)

    # Encoder(state_dim + skill_dim, hidden_dims, 1)
    dims = [state_dim + skill_dim] + hidden_dims + [1]
    params = init_mlp_params(kp, dims)

    fwd = jax.jit(functools.partial(concat_critic_forward, temperature=temperature))
    out = fwd(x, y, params)
    out = jax.block_until_ready(out)

    ref = reference_forward(x, y, params, temperature=temperature)
    assert out.shape == (batch, batch)
    # bf16 MXU path -> looser tolerance than the pure-f32 variant.
    assert jnp.allclose(out, ref, atol=5e-2, rtol=5e-2), "mismatch vs pure-JAX reference"

    print("KERNEL_OK")
</pallas_src>

<mosaic_0001>
module attributes {stable_mosaic.version = 11 : i64} {
  func.func @kernel(%arg0: i32, %arg1: i32, %arg2: memref<8x64xf32, #tpu.memory_space<vmem>>, %arg3: memref<8x64xf32, #tpu.memory_space<vmem>>, %arg4: memref<64x64xbf16, #tpu.memory_space<vmem>>, %arg5: memref<1x64xf32, #tpu.memory_space<vmem>>, %arg6: memref<1x64xf32, #tpu.memory_space<vmem>>, %arg7: memref<1x1xf32, #tpu.memory_space<vmem>>, %arg8: memref<8x8xf32, #tpu.memory_space<vmem>>) attributes {dimension_semantics = [#tpu.dimension_semantics<parallel>, #tpu.dimension_semantics<parallel>], iteration_bounds = array<i64: 1, 1>, scalar_prefetch = 0 : i64, scratch_operands = 0 : i64, tpu.core_type = #tpu.core_type<tc>, window_params = [{transform_indices = @transform_0, window_bounds = array<i64: 8, 64>}, {transform_indices = @transform_1, window_bounds = array<i64: 8, 64>}, {pipeline_mode = #tpu.pipeline_mode<synchronous>, transform_indices = @transform_2, window_bounds = array<i64: 64, 64>}, {pipeline_mode = #tpu.pipeline_mode<synchronous>, transform_indices = @transform_3, window_bounds = array<i64: 1, 64>}, {pipeline_mode = #tpu.pipeline_mode<synchronous>, transform_indices = @transform_4, window_bounds = array<i64: 1, 64>}, {pipeline_mode = #tpu.pipeline_mode<synchronous>, transform_indices = @transform_5, window_bounds = array<i64: 1, 1>}, {transform_indices = @transform_6, window_bounds = array<i64: 8, 8>}]} {
    %c0 = arith.constant 0 : index
    %c0_0 = arith.constant 0 : index
    %0 = vector.load %arg2[%c0, %c0_0] : memref<8x64xf32, #tpu.memory_space<vmem>>, vector<8x64xf32>
    %1 = vector.shape_cast %0 : vector<8x64xf32> to vector<8x1x64xf32>
    %c0_1 = arith.constant 0 : index
    %c0_2 = arith.constant 0 : index
    %2 = vector.load %arg3[%c0_1, %c0_2] : memref<8x64xf32, #tpu.memory_space<vmem>>, vector<8x64xf32>
    %3 = vector.shape_cast %2 : vector<8x64xf32> to vector<1x8x64xf32>
    %4 = vector.broadcast %1 : vector<8x1x64xf32> to vector<8x8x64xf32>
    %5 = vector.broadcast %3 : vector<1x8x64xf32> to vector<8x8x64xf32>
    %6 = arith.addf %4, %5 : vector<8x8x64xf32>
    %cst = arith.constant 0.000000e+00 : f32
    %7 = vector.broadcast %cst : f32 to vector<8x8x64xf32>
    %8 = arith.maximumf %6, %7 : vector<8x8x64xf32>
    %9 = vector.shape_cast %8 : vector<8x8x64xf32> to vector<64x64xf32>
    %c0_3 = arith.constant 0 : index
    %c0_4 = arith.constant 0 : index
    %10 = vector.load %arg4[%c0_3, %c0_4] : memref<64x64xbf16, #tpu.memory_space<vmem>>, vector<64x64xbf16>
    %c0_5 = arith.constant 0 : index
    %c0_6 = arith.constant 0 : index
    %11 = vector.load %arg5[%c0_5, %c0_6] : memref<1x64xf32, #tpu.memory_space<vmem>>, vector<1x64xf32>
    %12 = arith.truncf %9 : vector<64x64xf32> to vector<64x64xbf16>
    %cst_7 = arith.constant dense<0.000000e+00> : vector<64x64xf32>
    %13 = tpu.matmul %12, %10, %cst_7 {dimension_numbers = #tpu.dot_dimension_numbers<[1], [0], [0], [1], [0, 0, 1, 1], [], []>} : vector<64x64xbf16>, vector<64x64xbf16>, vector<64x64xf32> -> vector<64x64xf32>
    %14 = vector.broadcast %11 : vector<1x64xf32> to vector<64x64xf32>
    %15 = arith.addf %13, %14 : vector<64x64xf32>
    %cst_8 = arith.constant 0.000000e+00 : f32
    %16 = vector.broadcast %cst_8 : f32 to vector<64x64xf32>
    %17 = arith.maximumf %15, %16 : vector<64x64xf32>
    %18 = vector.shape_cast %17 : vector<64x64xf32> to vector<8x8x64xf32>
    %c0_9 = arith.constant 0 : index
    %c0_10 = arith.constant 0 : index
    %19 = vector.load %arg6[%c0_9, %c0_10] : memref<1x64xf32, #tpu.memory_space<vmem>>, vector<1x64xf32>
    %20 = vector.shape_cast %19 : vector<1x64xf32> to vector<1x1x64xf32>
    %21 = vector.broadcast %20 : vector<1x1x64xf32> to vector<8x8x64xf32>
    %22 = arith.mulf %18, %21 : vector<8x8x64xf32>
    %cst_11 = arith.constant dense<0.000000e+00> : vector<8x8xf32>
    %23 = vector.multi_reduction <add>, %22, %cst_11 [2] : vector<8x8x64xf32> to vector<8x8xf32>
    %c0_12 = arith.constant 0 : index
    %c0_13 = arith.constant 0 : index
    %24 = vector.load %arg7[%c0_12, %c0_13] : memref<1x1xf32, #tpu.memory_space<vmem>>, vector<1x1xf32>
    %25 = vector.broadcast %24 : vector<1x1xf32> to vector<8x8xf32>
    %26 = arith.addf %23, %25 : vector<8x8xf32>
    %c0_14 = arith.constant 0 : index
    %c0_15 = arith.constant 0 : index
    %27 = vector.load %arg8[%c0_14, %c0_15] : memref<8x8xf32, #tpu.memory_space<vmem>>, vector<8x8xf32>
    tpu.vector_store %arg8[%c0_14, %c0_15], %26 {strides = array<i32>} : memref<8x8xf32, #tpu.memory_space<vmem>>, vector<8x8xf32>,
    return
  }
  func.func @transform_0(%arg0: i32, %arg1: i32) -> (i32, i32) {
    %c0_i32 = arith.constant 0 : i32
    %c0_i32_0 = arith.constant 0 : i32
    return %arg0, %c0_i32 : i32, i32
  }
  func.func @transform_1(%arg0: i32, %arg1: i32) -> (i32, i32) {
    %c0_i32 = arith.constant 0 : i32
    %c0_i32_0 = arith.constant 0 : i32
    return %arg1, %c0_i32 : i32, i32
  }
  func.func @transform_2(%arg0: i32, %arg1: i32) -> (i32, i32) {
    %c0_i32 = arith.constant 0 : i32
    %c0_i32_0 = arith.constant 0 : i32
    %c0_i32_1 = arith.constant 0 : i32
    return %c0_i32, %c0_i32_0 : i32, i32
  }
  func.func @transform_3(%arg0: i32, %arg1: i32) -> (i32, i32) {
    %c0_i32 = arith.constant 0 : i32
    %c0_i32_0 = arith.constant 0 : i32
    %c0_i32_1 = arith.constant 0 : i32
    return %c0_i32, %c0_i32_0 : i32, i32
  }
  func.func @transform_4(%arg0: i32, %arg1: i32) -> (i32, i32) {
    %c0_i32 = arith.constant 0 : i32
    %c0_i32_0 = arith.constant 0 : i32
    %c0_i32_1 = arith.constant 0 : i32
    return %c0_i32, %c0_i32_0 : i32, i32
  }
  func.func @transform_5(%arg0: i32, %arg1: i32) -> (i32, i32) {
    %c0_i32 = arith.constant 0 : i32
    %c0_i32_0 = arith.constant 0 : i32
    %c0_i32_1 = arith.constant 0 : i32
    return %c0_i32, %c0_i32_0 : i32, i32
  }
  func.func @transform_6(%arg0: i32, %arg1: i32) -> (i32, i32) {
    %c0_i32 = arith.constant 0 : i32
    return %arg0, %arg1 : i32, i32
  }
}

</mosaic_0001>

<llo_original>
// kernel: concat_critic_forward.1
$region0: #{concat_critic_forward.1}
  #allocation0 [shape = 'u32[]', space=smem, size = 0x4, offset = 0x4, fixed_abs, tag = 'smem constant byte address 0x4 - core index']
  #allocation1 [shape = 'u32[144,128]{1,0:T(1,128)}', space=vmem, size = 0x12000, scoped, tag = 'internal scratch']
  #allocation2 [shape = 'f32[1,1]{1,0:T(1,128)S(1)}', space=vmem, size = 0x200, scoped, tag = 'scoped memory for concat_critic_forward.1']
  %s0 = inlined_call_operand.vmem [shape: f32[8,64], index: 0, kind: input, shape index: {}]
  %s1 = inlined_call_operand.vmem [shape: f32[8,64], index: 1, kind: input, shape index: {}]
  %s2 = inlined_call_operand.vmem [shape: bf16[64,64], index: 2, kind: input, shape index: {}]
  %s3 = inlined_call_operand.vmem [shape: f32[1,64], index: 3, kind: input, shape index: {}]
  %s4 = inlined_call_operand.vmem [shape: f32[1,64], index: 4, kind: input, shape index: {}]
  %s5 = inlined_call_operand.<no memory space> [shape: f32[1,1], index: 5, kind: input, shape index: {}]
  %s6 = inlined_call_operand.hbm [shape: f32[8,8], index: 6, kind: output, shape index: {}]
  %s7 = sld [smem:[#allocation0]]
  $region34: #{concat_critic_forward.1} parent=0
    _
  %s9 = ssub.s32 1, %s7
  %s10 = scalar_select 0, %s9, %s7
  %v11 = vstv %s5
  %12 = vst [vmem:[#allocation2] sm:$0x1] %v11
  $region1: #{concat_critic_forward.1} parent=0
    #allocation3 [shape = 'u8[4096]{0}', space=vmem, size = 0x1000, scoped, tag = 'output window, operand 0, single buffered']
    #allocation4 [shape = 's32[1]{0}', space=sflag, size = 0x4, scoped, tag = 'scoped memory for concat_critic_forward.1']
    %13 = vsyncpa [#allocation4], 0
    // Predicated region
    $region2: #{concat_critic_forward.1} parent=1 // pred_check
      _
    $region3: #{concat_critic_forward.1} parent=1 // pred_check_branch
      %15 = sbr.rel (0) target = $region5
    $region4: #{concat_critic_forward.1} parent=1 // pred_region
      _
    $region5: #{concat_critic_forward.1} parent=1 // pred_fallthru
      _
    // Predicated region
    $region6: #{concat_critic_forward.1} parent=1 // pred_check
      _
    $region7: #{concat_critic_forward.1} parent=1 // pred_check_branch
      %17 = sbr.rel (0) target = $region9
    $region8: #{concat_critic_forward.1} parent=1 // pred_region
      _
    $region9: #{concat_critic_forward.1} parent=1 // pred_fallthru
      _
    // Predicated region
    $region10: #{concat_critic_forward.1} parent=1 // pred_check
      _
    $region11: #{concat_critic_forward.1} parent=1 // pred_check_branch
      %19 = sbr.rel (0) target = $region13
    $region12: #{concat_critic_forward.1} parent=1 // pred_region
      _
    $region13: #{concat_critic_forward.1} parent=1 // pred_fallthru
      _
    // Predicated region
    $region14: #{concat_critic_forward.1} parent=1 // pred_check
      _
    $region15: #{concat_critic_forward.1} parent=1 // pred_check_branch
      %21 = sbr.rel (0) target = $region17
    $region16: #{concat_critic_forward.1} parent=1 // pred_region
      _
    $region17: #{concat_critic_forward.1} parent=1 // pred_fallthru
      _
    // Predicated region
    $region18: #{concat_critic_forward.1} parent=1 // pred_check
      _
    $region19: #{concat_critic_forward.1} parent=1 // pred_check_branch
      %23 = sbr.rel (0) target = $region21
    $region20: #{concat_critic_forward.1} parent=1 // pred_region
      _
    $region21: #{concat_critic_forward.1} parent=1 // pred_fallthru
      _
    // Predicated region
    $region22: #{concat_critic_forward.1} parent=1 // pred_check
      _
    $region23: #{concat_critic_forward.1} parent=1 // pred_check_branch
      %25 = sbr.rel (0) target = $region25
    $region24: #{concat_critic_forward.1} parent=1 // pred_region
      _
    $region25: #{concat_critic_forward.1} parent=1 // pred_fallthru
      _
    %v27 = vld [vmem:[%s0] sm:$0xff]
    %v29 = vcombine.high %v27, %v27
    %v31 = vunpack.c.l.s4 1966171168
    %v32 = vunpack.c.0.s8 %v31
    %v33 = vlaneseq
    %v34 = vshrl.u32 %v33, 7
    %v35 = vsub.s32 %v32, %v34
    %v36 = vrot.slane %v27, %v35
    %v38 = vunpack.c.l.s4 1966171168
    %v39 = vunpack.c.0.s8 %v38
    %v40 = vlaneseq
    %v41 = vshrl.u32 %v40, 7
    %v42 = vsub.s32 %v39, %v41
    %v43 = vrot.slane %v29, %v42
    %v44 = vcombine.high %v36, %v36
    %v45 = vcombine.high %v43, %v43
    %v47 = vunpack.c.l.s4 1966171168
    %v48 = vunpack.c.0.s8 %v47
    %v49 = vlaneseq
    %v50 = vshrl.u32 %v49, 7
    %v51 = vsub.s32 %v48, %v50
    %v52 = vrot.slane %v36, %v51
    %v54 = vunpack.c.l.s4 1966171168
    %v55 = vunpack.c.0.s8 %v54
    %v56 = vlaneseq
    %v57 = vshrl.u32 %v56, 7
    %v58 = vsub.s32 %v55, %v57
    %v59 = vrot.slane %v43, %v58
    %v61 = vunpack.c.l.s4 1966171168
    %v62 = vunpack.c.0.s8 %v61
    %v63 = vlaneseq
    %v64 = vshrl.u32 %v63, 7
    %v65 = vsub.s32 %v62, %v64
    %v66 = vrot.slane %v44, %v65
    %v68 = vunpack.c.l.s4 1966171168
    %v69 = vunpack.c.0.s8 %v68
    %v70 = vlaneseq
    %v71 = vshrl.u32 %v70, 7
    %v72 = vsub.s32 %v69, %v71
    %v73 = vrot.slane %v45, %v72
    %v74 = vcombine.high %v52, %v52
    %v75 = vcombine.high %v59, %v59
    %v76 = vcombine.high %v66, %v66
    %v77 = vcombine.high %v73, %v73
    %v78 = vld [vmem:[%s1] sm:$0xff]
    %v79 = vlaneseq
    %v80 = vshrl.u32 %v79, 7
    %v81 = vsub.s32 0, %v80
    %v82 = vrot.slane %v52, %v81
    %v83 = vlaneseq
    %v84 = vshrl.u32 %v83, 7
    %v85 = vsub.s32 0, %v84
    %v86 = vrot.slane %v66, %v85
    %v87 = vlaneseq
    %v88 = vshrl.u32 %v87, 7
    %v89 = vsub.s32 0, %v88
    %v90 = vrot.slane %v74, %v89
    %v91 = vlaneseq
    %v92 = vshrl.u32 %v91, 7
    %v93 = vsub.s32 0, %v92
    %v94 = vrot.slane %v76, %v93
    %v95 = vlaneseq
    %v96 = vshrl.u32 %v95, 7
    %v97 = vsub.s32 0, %v96
    %v98 = vrot.slane %v59, %v97
    %v99 = vlaneseq
    %v100 = vshrl.u32 %v99, 7
    %v101 = vsub.s32 0, %v100
    %v102 = vrot.slane %v73, %v101
    %v103 = vlaneseq
    %v104 = vshrl.u32 %v103, 7
    %v105 = vsub.s32 0, %v104
    %v106 = vrot.slane %v75, %v105
    %v107 = vlaneseq
    %v108 = vshrl.u32 %v107, 7
    %v109 = vsub.s32 0, %v108
    %v110 = vrot.slane %v77, %v109
    %v119 = vadd.f32 %v82, %v78
    %v120 = vadd.f32 %v86, %v78
    %v121 = vadd.f32 %v90, %v78
    %v122 = vadd.f32 %v94, %v78
    %v123 = vadd.f32 %v98, %v78
    %v124 = vadd.f32 %v102, %v78
    %v125 = vadd.f32 %v106, %v78
    %v126 = vadd.f32 %v110, %v78
    %v127 = vmax.f32 %v119, 0.0
    %v128 = vmax.f32 %v120, 0.0
    %v129 = vmax.f32 %v121, 0.0
    %v130 = vmax.f32 %v122, 0.0
    %v131 = vmax.f32 %v123, 0.0
    %v132 = vmax.f32 %v124, 0.0
    %v133 = vmax.f32 %v125, 0.0
    %v134 = vmax.f32 %v126, 0.0
    %v135 = vld [vmem:[%s2] sm:$0xf]
    %v136 = vld [vmem:[%s2 + $0x4] sm:$0xf]
    %v137 = vld [vmem:[%s2 + $0x8] sm:$0xf]
    %v138 = vld [vmem:[%s2 + $0xc] sm:$0xf]
    %v139 = vld [vmem:[%s2 + $0x10] sm:$0xf]
    %v140 = vld [vmem:[%s2 + $0x14] sm:$0xf]
    %v141 = vld [vmem:[%s2 + $0x18] sm:$0xf]
    %v142 = vld [vmem:[%s2 + $0x1c] sm:$0xf]
    %v143 = vld [vmem:[%s3] sm:$0x1]
    %v144 = vpack.c.bf16 %v128, %v127
    %v145 = vpack.c.bf16 %v130, %v129
    %v146 = vpack.c.bf16 %v132, %v131
    %v147 = vpack.c.bf16 %v134, %v133
    %v149 = vlaneseq
    %v150 = vshrl.u32 %v149, 7
    %v151 = vsub.s32 0, %v150
    %v152 = vrot.slane %v143, %v151
    %v162 = vunpack.c.l.b16 %v135
    %v163 = vunpack.c.l.b16 %v136
    %v164 = vunpack.c.l.b16 %v137
    %v165 = vunpack.c.l.b16 %v138
    %v166 = vunpack.c.l.b16 %v139
    %v167 = vunpack.c.l.b16 %v140
    %v168 = vunpack.c.l.b16 %v141
    %v169 = vunpack.c.l.b16 %v142
    %v170 = vpack.c.b16 %v163, %v162
    %v171 = vpack.c.b16 %v165, %v164
    %v172 = vpack.c.b16 %v167, %v166
    %v173 = vpack.c.b16 %v169, %v168
    %vm178 = vcmask 523264
    %v180 = vsel %vm178, %v144, 0
    %v183 = vsel %vm178, %v145, 0
    %v186 = vsel %vm178, %v146, 0
    %v189 = vsel %vm178, %v147, 0
    %191 = vmatprep.subr.bf16.mxu0 0
    %192 = vmatpush1.bf16.msra.mxu0 %v170
    %193 = vmatprep.subr.bf16.mxu0 0
    %194 = vmatpush1.bf16.msra.mxu0 %v171
    %195 = vmatprep.subr.bf16.mxu0 0
    %196 = vmatpush1.bf16.msra.mxu0 %v172
    %197 = vmatprep.subr.bf16.mxu0 0
    %198 = vmatpush1.bf16.msra.mxu0 %v173
    %199 = vmatprep.subr.bf16.mxu0 0
    %200 = vmatpush1.bf16.msra.mxu0 0
    %201 = vmatprep.subr.bf16.mxu0 0
    %202 = vmatpush1.bf16.msra.mxu0 0
    %203 = vmatprep.subr.bf16.mxu0 0
    %204 = vmatpush1.bf16.msra.mxu0 0
    %205 = vmatprep.subr.bf16.mxu0 0
    %206 = vmatpush1.bf16.msra.mxu0 0
    %207 = vmatprep.subr.bf16.mxu0 0
    %208 = vmatpush1.bf16.msra.mxu0 0
    %209 = vmatprep.subr.bf16.mxu0 0
    %210 = vmatpush1.bf16.msra.mxu0 0
    %211 = vmatprep.subr.bf16.mxu0 0
    %212 = vmatpush1.bf16.msra.mxu0 0
    %213 = vmatprep.subr.bf16.mxu0 0
    %214 = vmatpush1.bf16.msra.mxu0 0
    %215 = vmatprep.subr.bf16.mxu0 0
    %216 = vmatpush1.bf16.msra.mxu0 0
    %217 = vmatprep.subr.bf16.mxu0 0
    %218 = vmatpush1.bf16.msra.mxu0 0
    %219 = vmatprep.subr.bf16.mxu0 0
    %220 = vmatpush1.bf16.msra.mxu0 0
    %221 = vmatprep.subr.bf16.mxu0 0
    %222 = vmatpush1.bf16.msra.mxu0 0
    %223 = vmatprep.mubr.bf16.mxu0 0
    %224 = vmatmul.mubr.bf16.gmra.mrb[0].mxu0 %v180
    %v225 = vpop.f32.mrb[0].mxu0
    %v226 = vadd.f32 %v152, %v225
    %v227 = vpop.f32.mrb[0].mxu0
    %v228 = vpop.f32.mrb[0].mxu0
    %v229 = vadd.f32 %v152, %v228
    %v230 = vpop.f32.mrb[0].mxu0
    %231 = vmatprep.mubr.bf16.mxu0 0
    %232 = vmatmul.mubr.bf16.gmra.mrb[0].mxu0 %v183
    %v233 = vpop.f32.mrb[0].mxu0
    %v234 = vadd.f32 %v152, %v233
    %v235 = vpop.f32.mrb[0].mxu0
    %v236 = vpop.f32.mrb[0].mxu0
    %v237 = vadd.f32 %v152, %v236
    %v238 = vpop.f32.mrb[0].mxu0
    %239 = vmatprep.mubr.bf16.mxu0 0
    %240 = vmatmul.mubr.bf16.gmra.mrb[0].mxu0 %v186
    %v241 = vpop.f32.mrb[0].mxu0
    %v242 = vadd.f32 %v152, %v241
    %v243 = vpop.f32.mrb[0].mxu0
    %v244 = vpop.f32.mrb[0].mxu0
    %v245 = vadd.f32 %v152, %v244
    %v246 = vpop.f32.mrb[0].mxu0
    %247 = vmatprep.mubr.bf16.mxu0 0
    %248 = vmatmul.mubr.bf16.gmra.mrb[0].mxu0 %v189
    %v249 = vpop.f32.mrb[0].mxu0
    %v250 = vadd.f32 %v152, %v249
    %v251 = vpop.f32.mrb[0].mxu0
    %v252 = vpop.f32.mrb[0].mxu0
    %v253 = vadd.f32 %v152, %v252
    %v254 = vpop.f32.mrb[0].mxu0
    %255 = vdwg.mxu0
    %v256 = vmax.f32 %v226, 0.0
    %v257 = vmax.f32 %v229, 0.0
    %v258 = vmax.f32 %v234, 0.0
    %v259 = vmax.f32 %v237, 0.0
    %v260 = vmax.f32 %v242, 0.0
    %v261 = vmax.f32 %v245, 0.0
    %v262 = vmax.f32 %v250, 0.0
    %v263 = vmax.f32 %v253, 0.0
    %v264 = vld [vmem:[%s4] sm:$0x1]
    %v266 = vlaneseq
    %v267 = vshrl.u32 %v266, 7
    %v268 = vsub.s32 0, %v267
    %v269 = vrot.slane %v264, %v268
    %v271 = vmul.f32 %v256, %v269
    %v272 = vmul.f32 %v257, %v269
    %v273 = vmul.f32 %v258, %v269
    %v274 = vmul.f32 %v259, %v269
    %v275 = vmul.f32 %v260, %v269
    %v276 = vmul.f32 %v261, %v269
    %v277 = vmul.f32 %v262, %v269
    %v278 = vmul.f32 %v263, %v269
    %v279 = vsel %vm178, %v271, 0.0
    %280 = vadd.xlane.f32.xlu0 %v279
    %v281 = vpop.xlane.xlu0 %280
    %v282 = vsel %vm178, %v272, 0.0
    %283 = vadd.xlane.f32.xlu0 %v282
    %v284 = vpop.xlane.xlu0 %283
    %v285 = vsel %vm178, %v273, 0.0
    %286 = vadd.xlane.f32.xlu0 %v285
    %v287 = vpop.xlane.xlu0 %286
    %v288 = vsel %vm178, %v274, 0.0
    %289 = vadd.xlane.f32.xlu0 %v288
    %v290 = vpop.xlane.xlu0 %289
    %v291 = vsel %vm178, %v275, 0.0
    %292 = vadd.xlane.f32.xlu0 %v291
    %v293 = vpop.xlane.xlu0 %292
    %v294 = vsel %vm178, %v276, 0.0
    %295 = vadd.xlane.f32.xlu0 %v294
    %v296 = vpop.xlane.xlu0 %295
    %v297 = vsel %vm178, %v277, 0.0
    %298 = vadd.xlane.f32.xlu0 %v297
    %v299 = vpop.xlane.xlu0 %298
    %v300 = vsel %vm178, %v278, 0.0
    %301 = vadd.xlane.f32.xlu0 %v300
    %v302 = vpop.xlane.xlu0 %301
    %v303 = vld [vmem:[#allocation2] sm:$0x1]
    %v305 = vlaneseq
    %v306 = vshrl.u32 %v305, 7
    %v307 = vsub.s32 0, %v306
    %v308 = vrot.slane %v303, %v307
    %309 = vset.pattern.permute.xlu0 0
    %310 = vperm.xlu0 %309, %v308
    %v311 = vpop.permute.xlu0 %310
    %v313 = vadd.f32 %v281, %v311
    %v314 = vadd.f32 %v284, %v311
    %v315 = vadd.f32 %v287, %v311
    %v316 = vadd.f32 %v290, %v311
    %v317 = vadd.f32 %v293, %v311
    %v318 = vadd.f32 %v296, %v311
    %v319 = vadd.f32 %v299, %v311
    %v320 = vadd.f32 %v302, %v311
    %v329 = vlaneseq
    %v330 = vand.u32 %v329, 127
    %v331 = vlaneseq
    %v332 = vshrl.u32 %v331, 7
    %v333 = vsub.s32 %v330, %v332
    %v334 = vrot.slane %v313, %v333
    %v335 = vlaneseq
    %v336 = vshrl.u32 %v335, 7
    %v337 = vsub.s32 %v330, %v336
    %v338 = vrot.slane %v314, %v337
    %v339 = vlaneseq
    %v340 = vshrl.u32 %v339, 7
    %v341 = vsub.s32 %v330, %v340
    %v342 = vrot.slane %v315, %v341
    %v343 = vlaneseq
    %v344 = vshrl.u32 %v343, 7
    %v345 = vsub.s32 %v330, %v344
    %v346 = vrot.slane %v316, %v345
    %v347 = vlaneseq
    %v348 = vshrl.u32 %v347, 7
    %v349 = vsub.s32 %v330, %v348
    %v350 = vrot.slane %v317, %v349
    %v351 = vlaneseq
    %v352 = vshrl.u32 %v351, 7
    %v353 = vsub.s32 %v330, %v352
    %v354 = vrot.slane %v318, %v353
    %v355 = vlaneseq
    %v356 = vshrl.u32 %v355, 7
    %v357 = vsub.s32 %v330, %v356
    %v358 = vrot.slane %v319, %v357
    %v359 = vlaneseq
    %v360 = vshrl.u32 %v359, 7
    %v361 = vsub.s32 %v330, %v360
    %v362 = vrot.slane %v320, %v361
    %vm363 = vcmask 1041409
    %v364 = vsel %vm363, %v338, %v334
    %vm365 = vcmask 1042434
    %v366 = vsel %vm365, %v342, %v364
    %vm367 = vcmask 1043459
    %v368 = vsel %vm367, %v346, %v366
    %vm369 = vcmask 1044484
    %v370 = vsel %vm369, %v350, %v368
    %vm371 = vcmask 1045509
    %v372 = vsel %vm371, %v354, %v370
    %vm373 = vcmask 1046534
    %v374 = vsel %vm373, %v358, %v372
    %vm375 = vcmask 1047559
    %v376 = vsel %vm375, %v362, %v374
    %vm378 = vcmask 64512
    %379 = vst.msk [vmem:[#allocation3] sm:$0xff] %vm378, %v376
    // Predicated region
    $region26: #{concat_critic_forward.1} parent=1 // pred_check
      _
    $region27: #{concat_critic_forward.1} parent=1 // pred_check_branch
      %381 = sbr.rel (0) target = $region29
    $region28: #{concat_critic_forward.1} parent=1 // pred_region
      %s383 = ssub.s32 128, 128
      %384 = vsyncadd [#allocation4], %s383
      %s386 = sshll.u32 [#allocation3], 4
      %s387 = int_to_ptr.vmem [resolvable:$true] %s386
      %389 = dma.vmem_to_hbm [thread:$0]  %s387, 128, %s6, [#allocation4]
    $region29: #{concat_critic_forward.1} parent=1 // pred_fallthru
      _
    // Predicated region
    $region30: #{concat_critic_forward.1} parent=1 // pred_check
      _
    $region31: #{concat_critic_forward.1} parent=1 // pred_check_branch
      %391 = sbr.rel (0) target = $region33
    $region32: #{concat_critic_forward.1} parent=1 // pred_region
      %392 = dma.done [#allocation4], 128
    $region33: #{concat_critic_forward.1} parent=1 // pred_fallthru
      _
    %393 = vsyncpa [#allocation4], 1

</llo_original>
